<compile_context>
chip_gen: v7x
topology: tpu7x:2x2x1
jax: 0.10.0
libtpu: 0.0.40
codegen_flags: <defaults>
</compile_context>

<pallas_src>
import numpy as np
import jax
import jax.numpy as jnp
from jax.experimental import pallas as pl
from jax.experimental.pallas import tpu as pltpu

EPS = 1e-5  # nn.InstanceNorm2d default eps (affine=False)


# ---------------- fused Pallas kernel ----------------

def _make_kernel(N, C, H, W, Ppad):
    Hp, Wp = H + 2, W + 2
    P = Hp * Wp                       # padded-flat spatial size (< Ppad)
    NC = N * C
    inv_cnt = 1.0 / float(H * W)

    # 3x3 tap offsets in padded-flat lane coordinates (row stride Wp).
    OFFS = [(di - 1) * Wp + (dj - 1) for di in range(3) for dj in range(3)]
    # pltpu.roll matches jnp.roll: rolled[p] = v[(p - shift) mod Ppad].
    # We need v[p + off]  ->  shift = (-off) mod Ppad.  For every interior
    # output lane p, p + off stays inside [0, P), so the wrap never matters.
    SHIFTS = [(-off) % Ppad for off in OFFS]
    S_R0, S_RL = (-2 * Wp) % Ppad, (2 * Wp) % Ppad    # reflect rows: h[p ± 2*Wp]
    S_C0, S_CL = (-2) % Ppad, 2                       # reflect cols: h[p ± 2]

    def kernel(x_ref, rc_ref, w1_ref, w2_ref, out_ref):
        x = x_ref[...]                                      # (NC, Ppad) f32
        # row/col index of every lane (-1 sentinel in the 128-alignment pad,
        # so all masks are automatically off there).
        r = jnp.broadcast_to(rc_ref[0:1, :], (NC, Ppad))
        c = jnp.broadcast_to(rc_ref[1:2, :], (NC, Ppad))
        interior = (r >= 1) & (r <= H) & (c >= 1) & (c <= W)
        row0, rowL = r == 0, r == Hp - 1
        col0, colL = c == 0, c == Wp - 1

        def conv(v, w_ref):
            # Single K = 9*N*C matmul: rolled taps stacked on the contraction
            # (sublane) axis; each piece is a full 8-sublane tile.
            taps = [v if s == 0 else pltpu.roll(v, s, 1) for s in SHIFTS]
            stacked = jnp.concatenate(taps, axis=0)         # (9*NC, Ppad)
            return jnp.dot(w_ref[...], stacked,
                           preferred_element_type=jnp.float32)

        def inorm(acc):
            # One-pass masked stats over the H*W interior lanes of each row
            # (each row of the batch-folded layout is one (n, c) instance).
            masked = jnp.where(interior, acc, 0.0)
            sx = jnp.sum(masked, axis=1, keepdims=True)
            sxx = jnp.sum(masked * acc, axis=1, keepdims=True)
            mean = sx * inv_cnt
            var = sxx * inv_cnt - mean * mean
            return (acc - mean) * jax.lax.rsqrt(var + EPS)

        # ---- stage 1: conv3x3(reflect_pad(x)) -> IN -> ReLU ----
        h = jnp.maximum(inorm(conv(x, w1_ref)), 0.0)        # border lanes: junk

        # ---- register-resident reflection pad of h (rows first, then cols,
        #      so the corners pick up already-row-reflected values) ----
        h = jnp.where(row0, pltpu.roll(h, S_R0, 1),
            jnp.where(rowL, pltpu.roll(h, S_RL, 1), h))
        h = jnp.where(col0, pltpu.roll(h, S_C0, 1),
            jnp.where(colL, pltpu.roll(h, S_CL, 1), h))

        # ---- stage 2: conv3x3(h) -> IN -> residual add ----
        out_ref[...] = x + inorm(conv(h, w2_ref))

    return kernel


def _residual_block_impl(x, w1, b1, w2, b2):
    """x: (N, C, H, W); w*: (C, C, 3, 3); b*: (C,). Returns (N, C, H, W).

    Conv biases are intentionally unused: InstanceNorm(affine=False) cancels a
    spatially constant bias exactly.
    """
    del b1, b2
    N, C, H, W = x.shape
    Hp, Wp = H + 2, W + 2
    P = Hp * Wp
    Ppad = ((P + 127) // 128) * 128          # lane-align the flat spatial axis
    NC = N * C

    # Reflection-padded, lane-flattened, batch-folded (N*C sublanes) input,
    # zero-padded on the lane axis up to a multiple of 128.
    xpad = jnp.pad(x.astype(jnp.float32),
                   ((0, 0), (0, 0), (1, 1), (1, 1)), mode="reflect")
    xf = jnp.pad(xpad.reshape(NC, P), ((0, 0), (0, Ppad - P)))

    # Batch-block-diagonal per-tap channel mixers flattened to (NC, 9*NC):
    # Wbig[n*C+co, k*NC + m*C + ci] = delta(n, m) * w[co, ci, tap k].
    def big_weight(w):
        w_t = jnp.transpose(w.astype(jnp.float32), (2, 3, 0, 1)).reshape(9, C, C)
        wb = jnp.einsum("nm,kac->nakmc", jnp.eye(N, dtype=jnp.float32), w_t)
        return wb.reshape(NC, 9 * NC)

    # Row/col index of each padded-flat lane; -1 sentinel in the alignment pad.
    rr, cc = np.divmod(np.arange(P), Wp)
    rc_np = np.full((2, Ppad), -1, np.int32)
    rc_np[0, :P] = rr
    rc_np[1, :P] = cc

    out = pl.pallas_call(
        _make_kernel(N, C, H, W, Ppad),
        out_shape=jax.ShapeDtypeStruct((NC, Ppad), jnp.float32),
        grid=(1,),
        in_specs=[
            pl.BlockSpec((NC, Ppad), lambda i: (0, 0)),
            pl.BlockSpec((2, Ppad), lambda i: (0, 0)),
            pl.BlockSpec((NC, 9 * NC), lambda i: (0, 0)),
            pl.BlockSpec((NC, 9 * NC), lambda i: (0, 0)),
        ],
        out_specs=pl.BlockSpec((NC, Ppad), lambda i: (0, 0)),
        compiler_params=pltpu.CompilerParams(
            dimension_semantics=("arbitrary",)),
    )(xf, jnp.asarray(rc_np), big_weight(w1), big_weight(w2))

    return (out.reshape(N, C, Ppad)[:, :, :P]
               .reshape(N, C, Hp, Wp)[:, :, 1:-1, 1:-1])


residual_block = jax.jit(_residual_block_impl)


# ---------------- pure-JAX reference (for correctness check) ----------------

def _reference(x, w1, b1, w2, b2):
    def conv(x, w, b):
        xp = jnp.pad(x, ((0, 0), (0, 0), (1, 1), (1, 1)), mode="reflect")
        y = jax.lax.conv_general_dilated(
            xp, w, window_strides=(1, 1), padding="VALID",
            dimension_numbers=("NCHW", "OIHW", "NCHW"))
        return y + b[None, :, None, None]

    def inorm(y):
        m = y.mean(axis=(2, 3), keepdims=True)
        v = ((y - m) ** 2).mean(axis=(2, 3), keepdims=True)
        return (y - m) / jnp.sqrt(v + EPS)

    h = jax.nn.relu(inorm(conv(x, w1, b1)))
    return x + inorm(conv(h, w2, b2))


# ---------------- main ----------------

if __name__ == "__main__":
    N, C, H, W = 2, 4, 16, 16   # in_features = 4
    key = jax.random.PRNGKey(0)
    kx, kw1, kb1, kw2, kb2 = jax.random.split(key, 5)

    # deterministic PyTorch-style conv init: U(-1/sqrt(fan_in), 1/sqrt(fan_in))
    fan_in = C * 3 * 3
    bound = float(1.0 / np.sqrt(fan_in))
    x = jax.random.normal(kx, (N, C, H, W), dtype=jnp.float32)
    w1 = jax.random.uniform(kw1, (C, C, 3, 3), jnp.float32, -bound, bound)
    b1 = jax.random.uniform(kb1, (C,), jnp.float32, -bound, bound)
    w2 = jax.random.uniform(kw2, (C, C, 3, 3), jnp.float32, -bound, bound)
    b2 = jax.random.uniform(kb2, (C,), jnp.float32, -bound, bound)

    out = jax.block_until_ready(residual_block(x, w1, b1, w2, b2))
    ref = jax.block_until_ready(_reference(x, w1, b1, w2, b2))

    assert out.shape == (N, C, H, W)
    err = jnp.max(jnp.abs(out - ref))
    assert jnp.allclose(out, ref, atol=2e-4, rtol=2e-4), f"max abs err {err}"
    print("KERNEL_OK")
</pallas_src>

<mosaic_0001>
module attributes {stable_mosaic.version = 11 : i64} {
  func.func @kernel(%arg0: i32, %arg1: memref<8x384xf32, #tpu.memory_space<vmem>>, %arg2: memref<2x384xi32, #tpu.memory_space<vmem>>, %arg3: memref<8x72xf32, #tpu.memory_space<vmem>>, %arg4: memref<8x72xf32, #tpu.memory_space<vmem>>, %arg5: memref<8x384xf32, #tpu.memory_space<vmem>>) attributes {dimension_semantics = [#tpu.dimension_semantics<arbitrary>], iteration_bounds = array<i64: 1>, scalar_prefetch = 0 : i64, scratch_operands = 0 : i64, tpu.core_type = #tpu.core_type<tc>, window_params = [{pipeline_mode = #tpu.pipeline_mode<synchronous>, transform_indices = @transform_0, window_bounds = array<i64: 8, 384>}, {pipeline_mode = #tpu.pipeline_mode<synchronous>, transform_indices = @transform_1, window_bounds = array<i64: 2, 384>}, {pipeline_mode = #tpu.pipeline_mode<synchronous>, transform_indices = @transform_2, window_bounds = array<i64: 8, 72>}, {pipeline_mode = #tpu.pipeline_mode<synchronous>, transform_indices = @transform_3, window_bounds = array<i64: 8, 72>}, {pipeline_mode = #tpu.pipeline_mode<synchronous>, transform_indices = @transform_4, window_bounds = array<i64: 8, 384>}]} {
    %c0 = arith.constant 0 : index
    %c0_0 = arith.constant 0 : index
    %0 = vector.load %arg1[%c0, %c0_0] : memref<8x384xf32, #tpu.memory_space<vmem>>, vector<8x384xf32>
    %c0_1 = arith.constant 0 : index
    %c0_2 = arith.constant 0 : index
    %1 = vector.load %arg2[%c0_1, %c0_2] : memref<2x384xi32, #tpu.memory_space<vmem>>, vector<1x384xi32>
    %2 = vector.shape_cast %1 : vector<1x384xi32> to vector<1x384xi32>
    %3 = vector.broadcast %2 : vector<1x384xi32> to vector<8x384xi32>
    %c1 = arith.constant 1 : index
    %c0_3 = arith.constant 0 : index
    %4 = vector.load %arg2[%c1, %c0_3] : memref<2x384xi32, #tpu.memory_space<vmem>>, vector<1x384xi32>
    %5 = vector.shape_cast %4 : vector<1x384xi32> to vector<1x384xi32>
    %6 = vector.broadcast %5 : vector<1x384xi32> to vector<8x384xi32>
    %c1_i32 = arith.constant 1 : i32
    %7 = vector.broadcast %c1_i32 : i32 to vector<8x384xi32>
    %8 = arith.cmpi sge, %3, %7 : vector<8x384xi32>
    %c16_i32 = arith.constant 16 : i32
    %9 = vector.broadcast %c16_i32 : i32 to vector<8x384xi32>
    %10 = arith.cmpi sle, %3, %9 : vector<8x384xi32>
    %11 = arith.andi %8, %10 : vector<8x384xi1>
    %c1_i32_4 = arith.constant 1 : i32
    %12 = vector.broadcast %c1_i32_4 : i32 to vector<8x384xi32>
    %13 = arith.cmpi sge, %6, %12 : vector<8x384xi32>
    %14 = arith.andi %11, %13 : vector<8x384xi1>
    %c16_i32_5 = arith.constant 16 : i32
    %15 = vector.broadcast %c16_i32_5 : i32 to vector<8x384xi32>
    %16 = arith.cmpi sle, %6, %15 : vector<8x384xi32>
    %17 = arith.andi %14, %16 : vector<8x384xi1>
    %c0_i32 = arith.constant 0 : i32
    %18 = vector.broadcast %c0_i32 : i32 to vector<8x384xi32>
    %19 = arith.cmpi eq, %3, %18 : vector<8x384xi32>
    %c17_i32 = arith.constant 17 : i32
    %20 = vector.broadcast %c17_i32 : i32 to vector<8x384xi32>
    %21 = arith.cmpi eq, %3, %20 : vector<8x384xi32>
    %c0_i32_6 = arith.constant 0 : i32
    %22 = vector.broadcast %c0_i32_6 : i32 to vector<8x384xi32>
    %23 = arith.cmpi eq, %6, %22 : vector<8x384xi32>
    %c17_i32_7 = arith.constant 17 : i32
    %24 = vector.broadcast %c17_i32_7 : i32 to vector<8x384xi32>
    %25 = arith.cmpi eq, %6, %24 : vector<8x384xi32>
    %c19_i32 = arith.constant 19 : i32
    %26 = tpu.dynamic_rotate %0 by %c19_i32 dim 1 : vector<8x384xf32>, i32 -> vector<8x384xf32>
    %c18_i32 = arith.constant 18 : i32
    %27 = tpu.dynamic_rotate %0 by %c18_i32 dim 1 : vector<8x384xf32>, i32 -> vector<8x384xf32>
    %c17_i32_8 = arith.constant 17 : i32
    %28 = tpu.dynamic_rotate %0 by %c17_i32_8 dim 1 : vector<8x384xf32>, i32 -> vector<8x384xf32>
    %c1_i32_9 = arith.constant 1 : i32
    %29 = tpu.dynamic_rotate %0 by %c1_i32_9 dim 1 : vector<8x384xf32>, i32 -> vector<8x384xf32>
    %c383_i32 = arith.constant 383 : i32
    %30 = tpu.dynamic_rotate %0 by %c383_i32 dim 1 : vector<8x384xf32>, i32 -> vector<8x384xf32>
    %c367_i32 = arith.constant 367 : i32
    %31 = tpu.dynamic_rotate %0 by %c367_i32 dim 1 : vector<8x384xf32>, i32 -> vector<8x384xf32>
    %c366_i32 = arith.constant 366 : i32
    %32 = tpu.dynamic_rotate %0 by %c366_i32 dim 1 : vector<8x384xf32>, i32 -> vector<8x384xf32>
    %c365_i32 = arith.constant 365 : i32
    %33 = tpu.dynamic_rotate %0 by %c365_i32 dim 1 : vector<8x384xf32>, i32 -> vector<8x384xf32>
    %34 = tpu.concatenate %26, %27, %28, %29, %0, %30, %31, %32, %33 in 0 : vector<8x384xf32>, vector<8x384xf32>, vector<8x384xf32>, vector<8x384xf32>, vector<8x384xf32>, vector<8x384xf32>, vector<8x384xf32>, vector<8x384xf32>, vector<8x384xf32> -> vector<72x384xf32>
    %c0_10 = arith.constant 0 : index
    %c0_11 = arith.constant 0 : index
    %35 = vector.load %arg3[%c0_10, %c0_11] : memref<8x72xf32, #tpu.memory_space<vmem>>, vector<8x72xf32>
    %cst = arith.constant dense<0.000000e+00> : vector<8x384xf32>
    %36 = tpu.matmul %35, %34, %cst {dimension_numbers = #tpu.dot_dimension_numbers<[1], [0], [0], [1], [0, 0, 1, 1], [], []>} : vector<8x72xf32>, vector<72x384xf32>, vector<8x384xf32> -> vector<8x384xf32>
    %cst_12 = arith.constant 0.000000e+00 : f32
    %37 = vector.broadcast %cst_12 : f32 to vector<8x384xf32>
    %38 = arith.select %17, %36, %37 : vector<8x384xi1>, vector<8x384xf32>
    %cst_13 = arith.constant dense<0.000000e+00> : vector<8xf32>
    %39 = vector.multi_reduction <add>, %38, %cst_13 [1] : vector<8x384xf32> to vector<8xf32>
    %40 = vector.shape_cast %39 : vector<8xf32> to vector<8x1xf32>
    %41 = arith.mulf %38, %36 : vector<8x384xf32>
    %cst_14 = arith.constant dense<0.000000e+00> : vector<8xf32>
    %42 = vector.multi_reduction <add>, %41, %cst_14 [1] : vector<8x384xf32> to vector<8xf32>
    %43 = vector.shape_cast %42 : vector<8xf32> to vector<8x1xf32>
    %cst_15 = arith.constant 3.906250e-03 : f32
    %44 = vector.broadcast %cst_15 : f32 to vector<8x1xf32>
    %45 = arith.mulf %40, %44 : vector<8x1xf32>
    %cst_16 = arith.constant 3.906250e-03 : f32
    %46 = vector.broadcast %cst_16 : f32 to vector<8x1xf32>
    %47 = arith.mulf %43, %46 : vector<8x1xf32>
    %48 = arith.mulf %45, %45 : vector<8x1xf32>
    %49 = arith.subf %47, %48 : vector<8x1xf32>
    %50 = vector.broadcast %45 : vector<8x1xf32> to vector<8x384xf32>
    %51 = arith.subf %36, %50 : vector<8x384xf32>
    %cst_17 = arith.constant 9.99999974E-6 : f32
    %52 = vector.broadcast %cst_17 : f32 to vector<8x1xf32>
    %53 = arith.addf %49, %52 : vector<8x1xf32>
    %54 = math.rsqrt %53 : vector<8x1xf32>
    %55 = vector.broadcast %54 : vector<8x1xf32> to vector<8x384xf32>
    %56 = arith.mulf %51, %55 : vector<8x384xf32>
    %cst_18 = arith.constant 0.000000e+00 : f32
    %57 = vector.broadcast %cst_18 : f32 to vector<8x384xf32>
    %58 = arith.maximumf %56, %57 : vector<8x384xf32>
    %c348_i32 = arith.constant 348 : i32
    %59 = tpu.dynamic_rotate %58 by %c348_i32 dim 1 : vector<8x384xf32>, i32 -> vector<8x384xf32>
    %c36_i32 = arith.constant 36 : i32
    %60 = tpu.dynamic_rotate %58 by %c36_i32 dim 1 : vector<8x384xf32>, i32 -> vector<8x384xf32>
    %61 = arith.select %21, %60, %58 : vector<8x384xi1>, vector<8x384xf32>
    %62 = arith.select %19, %59, %61 : vector<8x384xi1>, vector<8x384xf32>
    %c382_i32 = arith.constant 382 : i32
    %63 = tpu.dynamic_rotate %62 by %c382_i32 dim 1 : vector<8x384xf32>, i32 -> vector<8x384xf32>
    %c2_i32 = arith.constant 2 : i32
    %64 = tpu.dynamic_rotate %62 by %c2_i32 dim 1 : vector<8x384xf32>, i32 -> vector<8x384xf32>
    %65 = arith.select %25, %64, %62 : vector<8x384xi1>, vector<8x384xf32>
    %66 = arith.select %23, %63, %65 : vector<8x384xi1>, vector<8x384xf32>
    %c19_i32_19 = arith.constant 19 : i32
    %67 = tpu.dynamic_rotate %66 by %c19_i32_19 dim 1 : vector<8x384xf32>, i32 -> vector<8x384xf32>
    %c18_i32_20 = arith.constant 18 : i32
    %68 = tpu.dynamic_rotate %66 by %c18_i32_20 dim 1 : vector<8x384xf32>, i32 -> vector<8x384xf32>
    %c17_i32_21 = arith.constant 17 : i32
    %69 = tpu.dynamic_rotate %66 by %c17_i32_21 dim 1 : vector<8x384xf32>, i32 -> vector<8x384xf32>
    %c1_i32_22 = arith.constant 1 : i32
    %70 = tpu.dynamic_rotate %66 by %c1_i32_22 dim 1 : vector<8x384xf32>, i32 -> vector<8x384xf32>
    %c383_i32_23 = arith.constant 383 : i32
    %71 = tpu.dynamic_rotate %66 by %c383_i32_23 dim 1 : vector<8x384xf32>, i32 -> vector<8x384xf32>
    %c367_i32_24 = arith.constant 367 : i32
    %72 = tpu.dynamic_rotate %66 by %c367_i32_24 dim 1 : vector<8x384xf32>, i32 -> vector<8x384xf32>
    %c366_i32_25 = arith.constant 366 : i32
    %73 = tpu.dynamic_rotate %66 by %c366_i32_25 dim 1 : vector<8x384xf32>, i32 -> vector<8x384xf32>
    %c365_i32_26 = arith.constant 365 : i32
    %74 = tpu.dynamic_rotate %66 by %c365_i32_26 dim 1 : vector<8x384xf32>, i32 -> vector<8x384xf32>
    %75 = tpu.concatenate %67, %68, %69, %70, %66, %71, %72, %73, %74 in 0 : vector<8x384xf32>, vector<8x384xf32>, vector<8x384xf32>, vector<8x384xf32>, vector<8x384xf32>, vector<8x384xf32>, vector<8x384xf32>, vector<8x384xf32>, vector<8x384xf32> -> vector<72x384xf32>
    %c0_27 = arith.constant 0 : index
    %c0_28 = arith.constant 0 : index
    %76 = vector.load %arg4[%c0_27, %c0_28] : memref<8x72xf32, #tpu.memory_space<vmem>>, vector<8x72xf32>
    %cst_29 = arith.constant dense<0.000000e+00> : vector<8x384xf32>
    %77 = tpu.matmul %76, %75, %cst_29 {dimension_numbers = #tpu.dot_dimension_numbers<[1], [0], [0], [1], [0, 0, 1, 1], [], []>} : vector<8x72xf32>, vector<72x384xf32>, vector<8x384xf32> -> vector<8x384xf32>
    %cst_30 = arith.constant 0.000000e+00 : f32
    %78 = vector.broadcast %cst_30 : f32 to vector<8x384xf32>
    %79 = arith.select %17, %77, %78 : vector<8x384xi1>, vector<8x384xf32>
    %cst_31 = arith.constant dense<0.000000e+00> : vector<8xf32>
    %80 = vector.multi_reduction <add>, %79, %cst_31 [1] : vector<8x384xf32> to vector<8xf32>
    %81 = vector.shape_cast %80 : vector<8xf32> to vector<8x1xf32>
    %82 = arith.mulf %79, %77 : vector<8x384xf32>
    %cst_32 = arith.constant dense<0.000000e+00> : vector<8xf32>
    %83 = vector.multi_reduction <add>, %82, %cst_32 [1] : vector<8x384xf32> to vector<8xf32>
    %84 = vector.shape_cast %83 : vector<8xf32> to vector<8x1xf32>
    %cst_33 = arith.constant 3.906250e-03 : f32
    %85 = vector.broadcast %cst_33 : f32 to vector<8x1xf32>
    %86 = arith.mulf %81, %85 : vector<8x1xf32>
    %cst_34 = arith.constant 3.906250e-03 : f32
    %87 = vector.broadcast %cst_34 : f32 to vector<8x1xf32>
    %88 = arith.mulf %84, %87 : vector<8x1xf32>
    %89 = arith.mulf %86, %86 : vector<8x1xf32>
    %90 = arith.subf %88, %89 : vector<8x1xf32>
    %91 = vector.broadcast %86 : vector<8x1xf32> to vector<8x384xf32>
    %92 = arith.subf %77, %91 : vector<8x384xf32>
    %cst_35 = arith.constant 9.99999974E-6 : f32
    %93 = vector.broadcast %cst_35 : f32 to vector<8x1xf32>
    %94 = arith.addf %90, %93 : vector<8x1xf32>
    %95 = math.rsqrt %94 : vector<8x1xf32>
    %96 = vector.broadcast %95 : vector<8x1xf32> to vector<8x384xf32>
    %97 = arith.mulf %92, %96 : vector<8x384xf32>
    %98 = arith.addf %0, %97 : vector<8x384xf32>
    %c0_36 = arith.constant 0 : index
    %c0_37 = arith.constant 0 : index
    %99 = vector.load %arg5[%c0_36, %c0_37] : memref<8x384xf32, #tpu.memory_space<vmem>>, vector<8x384xf32>
    tpu.vector_store %arg5[%c0_36, %c0_37], %98 {strides = array<i32>} : memref<8x384xf32, #tpu.memory_space<vmem>>, vector<8x384xf32>,
    return
  }
  func.func @transform_0(%arg0: i32) -> (i32, i32) {
    %c0_i32 = arith.constant 0 : i32
    %c0_i32_0 = arith.constant 0 : i32
    %c0_i32_1 = arith.constant 0 : i32
    return %c0_i32, %c0_i32_0 : i32, i32
  }
  func.func @transform_1(%arg0: i32) -> (i32, i32) {
    %c0_i32 = arith.constant 0 : i32
    %c0_i32_0 = arith.constant 0 : i32
    %c0_i32_1 = arith.constant 0 : i32
    return %c0_i32, %c0_i32_0 : i32, i32
  }
  func.func @transform_2(%arg0: i32) -> (i32, i32) {
    %c0_i32 = arith.constant 0 : i32
    %c0_i32_0 = arith.constant 0 : i32
    %c0_i32_1 = arith.constant 0 : i32
    return %c0_i32, %c0_i32_0 : i32, i32
  }
  func.func @transform_3(%arg0: i32) -> (i32, i32) {
    %c0_i32 = arith.constant 0 : i32
    %c0_i32_0 = arith.constant 0 : i32
    %c0_i32_1 = arith.constant 0 : i32
    return %c0_i32, %c0_i32_0 : i32, i32
  }
  func.func @transform_4(%arg0: i32) -> (i32, i32) {
    %c0_i32 = arith.constant 0 : i32
    %c0_i32_0 = arith.constant 0 : i32
    %c0_i32_1 = arith.constant 0 : i32
    return %c0_i32, %c0_i32_0 : i32, i32
  }
}

</mosaic_0001>

<llo_original>
// kernel: _residual_block_impl.1
$region0: #{_residual_block_impl.1}
  #allocation0 [shape = 'u32[]', space=smem, size = 0x4, offset = 0x4, fixed_abs, tag = 'smem constant byte address 0x4 - core index']
  #allocation1 [shape = 'u32[144,128]{1,0:T(1,128)}', space=vmem, size = 0x12000, scoped, tag = 'internal scratch']
  %s0 = inlined_call_operand.vmem [shape: f32[8,384], index: 0, kind: input, shape index: {}]
  %s1 = inlined_call_operand.vmem [shape: s32[2,384], index: 1, kind: input, shape index: {}]
  %s2 = inlined_call_operand.vmem [shape: f32[8,72], index: 2, kind: input, shape index: {}]
  %s3 = inlined_call_operand.vmem [shape: f32[8,72], index: 3, kind: input, shape index: {}]
  %s4 = inlined_call_operand.vmem [shape: f32[8,384], index: 4, kind: output, shape index: {}]
  %s5 = sld [smem:[#allocation0]]
  $region26: #{_residual_block_impl.1} parent=0
    _
  %s7 = ssub.s32 1, %s5
  %s8 = scalar_select 0, %s7, %s5
  // Predicated region
  $region2: #{_residual_block_impl.1} parent=0 // pred_check
    _
  $region3: #{_residual_block_impl.1} parent=0 // pred_check_branch
    %10 = sbr.rel (0) target = $region5
  $region4: #{_residual_block_impl.1} parent=0 // pred_region
    _
  $region5: #{_residual_block_impl.1} parent=0 // pred_fallthru
    _
  // Predicated region
  $region6: #{_residual_block_impl.1} parent=0 // pred_check
    _
  $region7: #{_residual_block_impl.1} parent=0 // pred_check_branch
    %12 = sbr.rel (0) target = $region9
  $region8: #{_residual_block_impl.1} parent=0 // pred_region
    _
  $region9: #{_residual_block_impl.1} parent=0 // pred_fallthru
    _
  // Predicated region
  $region10: #{_residual_block_impl.1} parent=0 // pred_check
    _
  $region11: #{_residual_block_impl.1} parent=0 // pred_check_branch
    %14 = sbr.rel (0) target = $region13
  $region12: #{_residual_block_impl.1} parent=0 // pred_region
    _
  $region13: #{_residual_block_impl.1} parent=0 // pred_fallthru
    _
  // Predicated region
  $region14: #{_residual_block_impl.1} parent=0 // pred_check
    _
  $region15: #{_residual_block_impl.1} parent=0 // pred_check_branch
    %16 = sbr.rel (0) target = $region17
  $region16: #{_residual_block_impl.1} parent=0 // pred_region
    _
  $region17: #{_residual_block_impl.1} parent=0 // pred_fallthru
    _
  %v17 = vld [vmem:[%s0] sm:$0xff]
  %v18 = vld [vmem:[%s0 + $0x8] sm:$0xff]
  %v19 = vld [vmem:[%s0 + $0x10] sm:$0xff]
  %v20 = vld [vmem:[%s1] ss:$2 sm:$0x7]
  %v21 = vlaneseq
  %v22 = vshrl.u32 %v21, 7
  %v23 = vsub.s32 0, %v22
  %v24 = vrot.slane %v20, %v23
  %v25 = vlaneseq
  %v26 = vshrl.u32 %v25, 7
  %v27 = vsub.s32 1, %v26
  %v28 = vrot.slane %v20, %v27
  %v29 = vlaneseq
  %v30 = vshrl.u32 %v29, 7
  %v31 = vsub.s32 2, %v30
  %v32 = vrot.slane %v20, %v31
  %s33 = scalar_lea.vmem %s1, 1
  %v34 = vld [vmem:[%s33] ss:$2 sm:$0x7]
  %v35 = vlaneseq
  %v36 = vshrl.u32 %v35, 7
  %v37 = vsub.s32 0, %v36
  %v38 = vrot.slane %v34, %v37
  %v39 = vlaneseq
  %v40 = vshrl.u32 %v39, 7
  %v41 = vsub.s32 1, %v40
  %v42 = vrot.slane %v34, %v41
  %v43 = vlaneseq
  %v44 = vshrl.u32 %v43, 7
  %v45 = vsub.s32 2, %v44
  %v46 = vrot.slane %v34, %v45
  %vm47 = vcmp.ge.s32.totalorder %v24, 1
  %vm48 = vcmp.ge.s32.totalorder %v28, 1
  %vm49 = vcmp.ge.s32.totalorder %v32, 1
  %vm50 = vcmp.le.s32.totalorder %v24, 16
  %vm51 = vcmp.le.s32.totalorder %v28, 16
  %vm52 = vcmp.le.s32.totalorder %v32, 16
  %vm53 = vmand %vm47, %vm50
  %vm54 = vmand %vm48, %vm51
  %vm55 = vmand %vm49, %vm52
  %vm56 = vcmp.ge.s32.totalorder %v38, 1
  %vm57 = vcmp.ge.s32.totalorder %v42, 1
  %vm58 = vcmp.ge.s32.totalorder %v46, 1
  %vm59 = vmand %vm53, %vm56
  %vm60 = vmand %vm54, %vm57
  %vm61 = vmand %vm55, %vm58
  %vm62 = vcmp.le.s32.totalorder %v38, 16
  %vm63 = vcmp.le.s32.totalorder %v42, 16
  %vm64 = vcmp.le.s32.totalorder %v46, 16
  %vm65 = vmand %vm59, %vm62
  %vm66 = vmand %vm60, %vm63
  %vm67 = vmand %vm61, %vm64
  %vm68 = vcmp.eq.s32.totalorder %v24, 0
  %vm69 = vcmp.eq.s32.totalorder %v28, 0
  %vm70 = vcmp.eq.s32.totalorder %v32, 0
  %vm71 = vcmp.eq.s32.totalorder %v24, 17
  %vm72 = vcmp.eq.s32.totalorder %v28, 17
  %vm73 = vcmp.eq.s32.totalorder %v32, 17
  %vm74 = vcmp.eq.s32.totalorder %v38, 0
  %vm75 = vcmp.eq.s32.totalorder %v42, 0
  %vm76 = vcmp.eq.s32.totalorder %v46, 0
  %vm77 = vcmp.eq.s32.totalorder %v38, 17
  %vm78 = vcmp.eq.s32.totalorder %v42, 17
  %vm79 = vcmp.eq.s32.totalorder %v46, 17
  %80 = vrot.lane.b32.xlu0 %v17, 19
  %v81 = vpop.permute.xlu0 %80
  %82 = vrot.lane.b32.xlu0 %v18, 19
  %v83 = vpop.permute.xlu0 %82
  %84 = vrot.lane.b32.xlu0 %v19, 19
  %v85 = vpop.permute.xlu0 %84
  %v86 = vlaneseq
  %v87 = vand.u32 %v86, 127
  %vm88 = vcmp.lt.s32.totalorder %v87, 19
  %v89 = vsel %vm88, %v83, %v85
  %v90 = vsel %vm88, %v81, %v83
  %v91 = vsel %vm88, %v85, %v81
  %92 = vrot.lane.b32.xlu0 %v17, 18
  %v93 = vpop.permute.xlu0 %92
  %94 = vrot.lane.b32.xlu0 %v18, 18
  %v95 = vpop.permute.xlu0 %94
  %96 = vrot.lane.b32.xlu0 %v19, 18
  %v97 = vpop.permute.xlu0 %96
  %vm98 = vcmp.lt.s32.totalorder %v87, 18
  %v99 = vsel %vm98, %v95, %v97
  %v100 = vsel %vm98, %v93, %v95
  %v101 = vsel %vm98, %v97, %v93
  %102 = vrot.lane.b32.xlu0 %v17, 17
  %v103 = vpop.permute.xlu0 %102
  %104 = vrot.lane.b32.xlu0 %v18, 17
  %v105 = vpop.permute.xlu0 %104
  %106 = vrot.lane.b32.xlu0 %v19, 17
  %v107 = vpop.permute.xlu0 %106
  %vm108 = vcmp.lt.s32.totalorder %v87, 17
  %v109 = vsel %vm108, %v105, %v107
  %v110 = vsel %vm108, %v103, %v105
  %v111 = vsel %vm108, %v107, %v103
  %112 = vrot.lane.b32.xlu0 %v17, 1
  %v113 = vpop.permute.xlu0 %112
  %114 = vrot.lane.b32.xlu0 %v18, 1
  %v115 = vpop.permute.xlu0 %114
  %116 = vrot.lane.b32.xlu0 %v19, 1
  %v117 = vpop.permute.xlu0 %116
  %vm118 = vcmp.lt.s32.totalorder %v87, 1
  %v119 = vsel %vm118, %v115, %v117
  %v120 = vsel %vm118, %v113, %v115
  %v121 = vsel %vm118, %v117, %v113
  %122 = vrot.lane.b32.xlu0 %v17, 127
  %v123 = vpop.permute.xlu0 %122
  %124 = vrot.lane.b32.xlu0 %v18, 127
  %v125 = vpop.permute.xlu0 %124
  %126 = vrot.lane.b32.xlu0 %v19, 127
  %v127 = vpop.permute.xlu0 %126
  %vm128 = vcmp.lt.s32.totalorder %v87, 127
  %v129 = vsel %vm128, %v125, %v127
  %v130 = vsel %vm128, %v123, %v125
  %v131 = vsel %vm128, %v127, %v123
  %132 = vrot.lane.b32.xlu0 %v17, 111
  %v133 = vpop.permute.xlu0 %132
  %134 = vrot.lane.b32.xlu0 %v18, 111
  %v135 = vpop.permute.xlu0 %134
  %136 = vrot.lane.b32.xlu0 %v19, 111
  %v137 = vpop.permute.xlu0 %136
  %vm138 = vcmp.lt.s32.totalorder %v87, 111
  %v139 = vsel %vm138, %v135, %v137
  %v140 = vsel %vm138, %v133, %v135
  %v141 = vsel %vm138, %v137, %v133
  %142 = vrot.lane.b32.xlu0 %v17, 110
  %v143 = vpop.permute.xlu0 %142
  %144 = vrot.lane.b32.xlu0 %v18, 110
  %v145 = vpop.permute.xlu0 %144
  %146 = vrot.lane.b32.xlu0 %v19, 110
  %v147 = vpop.permute.xlu0 %146
  %vm148 = vcmp.lt.s32.totalorder %v87, 110
  %v149 = vsel %vm148, %v145, %v147
  %v150 = vsel %vm148, %v143, %v145
  %v151 = vsel %vm148, %v147, %v143
  %152 = vrot.lane.b32.xlu0 %v17, 109
  %v153 = vpop.permute.xlu0 %152
  %154 = vrot.lane.b32.xlu0 %v18, 109
  %v155 = vpop.permute.xlu0 %154
  %156 = vrot.lane.b32.xlu0 %v19, 109
  %v157 = vpop.permute.xlu0 %156
  %vm158 = vcmp.lt.s32.totalorder %v87, 109
  %v159 = vsel %vm158, %v155, %v157
  %v160 = vsel %vm158, %v153, %v155
  %v161 = vsel %vm158, %v157, %v153
  %v162 = vld [vmem:[%s2] sm:$0xff]
  %vm163 = vcmask 588800
  %v165 = vsel %vm163, %v162, 0
  %167 = vmatprep.subr.mxu0 %v90
  %168 = vmatpush1.msra.mxu0 %v91
  %169 = vmatprep.subr.mxu0 %v100
  %170 = vmatpush1.msra.mxu0 %v101
  %171 = vmatprep.subr.mxu0 %v110
  %172 = vmatpush1.msra.mxu0 %v111
  %173 = vmatprep.subr.mxu0 %v120
  %174 = vmatpush1.msra.mxu0 %v121
  %175 = vmatprep.subr.mxu0 %v18
  %176 = vmatpush1.msra.mxu0 %v17
  %177 = vmatprep.subr.mxu0 %v129
  %178 = vmatpush1.msra.mxu0 %v130
  %179 = vmatprep.subr.mxu0 %v139
  %180 = vmatpush1.msra.mxu0 %v140
  %181 = vmatprep.subr.mxu0 %v149
  %182 = vmatpush1.msra.mxu0 %v150
  %183 = vmatprep.subr.mxu0 %v159
  %184 = vmatpush1.msra.mxu0 %v160
  %185 = vmatprep.subr.mxu0 0.0
  %186 = vmatpush1.msra.mxu0 0.0
  %187 = vmatprep.subr.mxu0 0.0
  %188 = vmatpush1.msra.mxu0 0.0
  %189 = vmatprep.subr.mxu0 0.0
  %190 = vmatpush1.msra.mxu0 0.0
  %191 = vmatprep.subr.mxu0 0.0
  %192 = vmatpush1.msra.mxu0 0.0
  %193 = vmatprep.subr.mxu0 0.0
  %194 = vmatpush1.msra.mxu0 0.0
  %195 = vmatprep.subr.mxu0 0.0
  %196 = vmatpush1.msra.mxu0 0.0
  %197 = vmatprep.subr.mxu0 0.0
  %198 = vmatpush1.msra.mxu0 0.0
  %199 = vmatprep.subr.mxu0 0.0
  %200 = vmatpush1.msra.mxu0 0.0
  %201 = vmatprep.subr.mxu0 0.0
  %202 = vmatpush1.msra.mxu0 0.0
  %203 = vmatprep.subr.mxu0 0.0
  %204 = vmatpush1.msra.mxu0 0.0
  %205 = vmatprep.subr.mxu0 0.0
  %206 = vmatpush1.msra.mxu0 0.0
  %207 = vmatprep.subr.mxu0 0.0
  %208 = vmatpush1.msra.mxu0 0.0
  %209 = vmatprep.subr.mxu0 0.0
  %210 = vmatpush1.msra.mxu0 0.0
  %211 = vmatprep.subr.mxu0 0.0
  %212 = vmatpush1.msra.mxu0 0.0
  %213 = vmatprep.subr.mxu0 0.0
  %214 = vmatpush1.msra.mxu0 0.0
  %215 = vmatprep.subr.mxu0 0.0
  %216 = vmatpush1.msra.mxu0 0.0
  %217 = vmatprep.subr.mxu0 0.0
  %218 = vmatpush1.msra.mxu0 0.0
  %219 = vmatprep.subr.mxu0 0.0
  %220 = vmatpush1.msra.mxu0 0.0
  %221 = vmatprep.subr.mxu0 0.0
  %222 = vmatpush1.msra.mxu0 0.0
  %223 = vmatprep.subr.mxu0 0.0
  %224 = vmatpush1.msra.mxu0 0.0
  %225 = vmatprep.subr.mxu0 0.0
  %226 = vmatpush1.msra.mxu0 0.0
  %227 = vmatprep.subr.mxu0 0.0
  %228 = vmatpush1.msra.mxu0 0.0
  %229 = vmatprep.subr.mxu0 0.0
  %230 = vmatpush1.msra.mxu0 0.0
  %231 = vmatprep.mubr.f32.mxu0 0.0
  %232 = vmatmul.mubr.f32.gmra.mrb[0].mxu0 %v165
  %v233 = vpop.f32.mrb[0].mxu0
  %v234 = vadd.f32 0.0, %v233
  %v235 = vpop.f32.mrb[0].mxu0
  %v236 = vadd.f32 0.0, %v235
  %237 = vdwg.mxu0
  %238 = vmatprep.subr.mxu0 0.0
  %239 = vmatpush1.msra.mxu0 %v89
  %240 = vmatprep.subr.mxu0 0.0
  %241 = vmatpush1.msra.mxu0 %v99
  %242 = vmatprep.subr.mxu0 0.0
  %243 = vmatpush1.msra.mxu0 %v109
  %244 = vmatprep.subr.mxu0 0.0
  %245 = vmatpush1.msra.mxu0 %v119
  %246 = vmatprep.subr.mxu0 0.0
  %247 = vmatpush1.msra.mxu0 %v19
  %248 = vmatprep.subr.mxu0 0.0
  %249 = vmatpush1.msra.mxu0 %v131
  %250 = vmatprep.subr.mxu0 0.0
  %251 = vmatpush1.msra.mxu0 %v141
  %252 = vmatprep.subr.mxu0 0.0
  %253 = vmatpush1.msra.mxu0 %v151
  %254 = vmatprep.subr.mxu0 0.0
  %255 = vmatpush1.msra.mxu0 %v161
  %256 = vmatprep.subr.mxu0 0.0
  %257 = vmatpush1.msra.mxu0 0.0
  %258 = vmatprep.subr.mxu0 0.0
  %259 = vmatpush1.msra.mxu0 0.0
  %260 = vmatprep.subr.mxu0 0.0
  %261 = vmatpush1.msra.mxu0 0.0
  %262 = vmatprep.subr.mxu0 0.0
  %263 = vmatpush1.msra.mxu0 0.0
  %264 = vmatprep.subr.mxu0 0.0
  %265 = vmatpush1.msra.mxu0 0.0
  %266 = vmatprep.subr.mxu0 0.0
  %267 = vmatpush1.msra.mxu0 0.0
  %268 = vmatprep.subr.mxu0 0.0
  %269 = vmatpush1.msra.mxu0 0.0
  %270 = vmatprep.subr.mxu0 0.0
  %271 = vmatpush1.msra.mxu0 0.0
  %272 = vmatprep.subr.mxu0 0.0
  %273 = vmatpush1.msra.mxu0 0.0
  %274 = vmatprep.subr.mxu0 0.0
  %275 = vmatpush1.msra.mxu0 0.0
  %276 = vmatprep.subr.mxu0 0.0
  %277 = vmatpush1.msra.mxu0 0.0
  %278 = vmatprep.subr.mxu0 0.0
  %279 = vmatpush1.msra.mxu0 0.0
  %280 = vmatprep.subr.mxu0 0.0
  %281 = vmatpush1.msra.mxu0 0.0
  %282 = vmatprep.subr.mxu0 0.0
  %283 = vmatpush1.msra.mxu0 0.0
  %284 = vmatprep.subr.mxu0 0.0
  %285 = vmatpush1.msra.mxu0 0.0
  %286 = vmatprep.subr.mxu0 0.0
  %287 = vmatpush1.msra.mxu0 0.0
  %288 = vmatprep.subr.mxu0 0.0
  %289 = vmatpush1.msra.mxu0 0.0
  %290 = vmatprep.subr.mxu0 0.0
  %291 = vmatpush1.msra.mxu0 0.0
  %292 = vmatprep.subr.mxu0 0.0
  %293 = vmatpush1.msra.mxu0 0.0
  %294 = vmatprep.subr.mxu0 0.0
  %295 = vmatpush1.msra.mxu0 0.0
  %296 = vmatprep.subr.mxu0 0.0
  %297 = vmatpush1.msra.mxu0 0.0
  %298 = vmatprep.subr.mxu0 0.0
  %299 = vmatpush1.msra.mxu0 0.0
  %300 = vmatprep.subr.mxu0 0.0
  %301 = vmatpush1.msra.mxu0 0.0
  %302 = vmatprep.mubr.f32.mxu0 0.0
  %303 = vmatmul.mubr.f32.gmra.mrb[0].mxu0 %v165
  %v304 = vpop.f32.mrb[0].mxu0
  %v305 = vadd.f32 0.0, %v304
  %v306 = vpop.f32.mrb[0].mxu0
  %307 = vdwg.mxu0
  %v308 = vsel %vm65, %v234, 0.0
  %v309 = vsel %vm66, %v236, 0.0
  %v310 = vsel %vm67, %v305, 0.0
  %v311 = vadd.f32 %v308, %v309
  %v312 = vadd.f32 %v311, %v310
  %313 = vadd.xlane.f32.xlu0 %v312
  %v314 = vpop.xlane.xlu0 %313
  %v315 = vmul.f32 %v308, %v234
  %v316 = vmul.f32 %v309, %v236
  %v317 = vmul.f32 %v310, %v305
  %v318 = vadd.f32 %v315, %v316
  %v319 = vadd.f32 %v318, %v317
  %320 = vadd.xlane.f32.xlu0 %v319
  %v321 = vpop.xlane.xlu0 %320
  %v322 = vmul.f32 %v314, 0.00390625
  %v323 = vmul.f32 %v321, 0.00390625
  %v324 = vmul.f32 %v322, %v322
  %v325 = vsub.f32 %v323, %v324
  %v326 = vsub.f32 %v234, %v322
  %v327 = vsub.f32 %v236, %v322
  %v328 = vsub.f32 %v305, %v322
  %v329 = vadd.f32 %v325, 1e-05
  %v330 = vrsqrt.pop %v329
  %v331 = vmul.f32 %v326, %v330
  %v332 = vmul.f32 %v327, %v330
  %v333 = vmul.f32 %v328, %v330
  %v334 = vmax.f32 %v331, 0.0
  %v335 = vmax.f32 %v332, 0.0
  %v336 = vmax.f32 %v333, 0.0
  %337 = vrot.lane.b32.xlu0 %v334, 92
  %v338 = vpop.permute.xlu0 %337
  %339 = vrot.lane.b32.xlu0 %v335, 92
  %v340 = vpop.permute.xlu0 %339
  %341 = vrot.lane.b32.xlu0 %v336, 92
  %v342 = vpop.permute.xlu0 %341
  %vm343 = vcmp.lt.s32.totalorder %v87, 92
  %v344 = vsel %vm343, %v340, %v342
  %v345 = vsel %vm343, %v338, %v340
  %v346 = vsel %vm343, %v342, %v338
  %347 = vrot.lane.b32.xlu0 %v334, 36
  %v348 = vpop.permute.xlu0 %347
  %349 = vrot.lane.b32.xlu0 %v335, 36
  %v350 = vpop.permute.xlu0 %349
  %351 = vrot.lane.b32.xlu0 %v336, 36
  %v352 = vpop.permute.xlu0 %351
  %vm353 = vcmp.lt.s32.totalorder %v87, 36
  %v354 = vsel %vm353, %v350, %v352
  %v355 = vsel %vm353, %v348, %v350
  %v356 = vsel %vm353, %v352, %v348
  %v357 = vsel %vm71, %v356, %v334
  %v358 = vsel %vm72, %v355, %v335
  %v359 = vsel %vm73, %v354, %v336
  %v360 = vsel %vm68, %v345, %v357
  %v361 = vsel %vm69, %v344, %v358
  %v362 = vsel %vm70, %v346, %v359
  %363 = vrot.lane.b32.xlu0 %v360, 126
  %v364 = vpop.permute.xlu0 %363
  %365 = vrot.lane.b32.xlu0 %v361, 126
  %v366 = vpop.permute.xlu0 %365
  %367 = vrot.lane.b32.xlu0 %v362, 126
  %v368 = vpop.permute.xlu0 %367
  %vm369 = vcmp.lt.s32.totalorder %v87, 126
  %v370 = vsel %vm369, %v366, %v368
  %v371 = vsel %vm369, %v364, %v366
  %v372 = vsel %vm369, %v368, %v364
  %373 = vrot.lane.b32.xlu0 %v360, 2
  %v374 = vpop.permute.xlu0 %373
  %375 = vrot.lane.b32.xlu0 %v361, 2
  %v376 = vpop.permute.xlu0 %375
  %377 = vrot.lane.b32.xlu0 %v362, 2
  %v378 = vpop.permute.xlu0 %377
  %vm379 = vcmp.lt.s32.totalorder %v87, 2
  %v380 = vsel %vm379, %v376, %v378
  %v381 = vsel %vm379, %v374, %v376
  %v382 = vsel %vm379, %v378, %v374
  %v383 = vsel %vm77, %v382, %v360
  %v384 = vsel %vm78, %v381, %v361
  %v385 = vsel %vm79, %v380, %v362
  %v386 = vsel %vm74, %v371, %v383
  %v387 = vsel %vm75, %v370, %v384
  %v388 = vsel %vm76, %v372, %v385
  %389 = vrot.lane.b32.xlu0 %v386, 19
  %v390 = vpop.permute.xlu0 %389
  %391 = vrot.lane.b32.xlu0 %v387, 19
  %v392 = vpop.permute.xlu0 %391
  %393 = vrot.lane.b32.xlu0 %v388, 19
  %v394 = vpop.permute.xlu0 %393
  %v395 = vsel %vm88, %v392, %v394
  %v396 = vsel %vm88, %v390, %v392
  %v397 = vsel %vm88, %v394, %v390
  %398 = vrot.lane.b32.xlu0 %v386, 18
  %v399 = vpop.permute.xlu0 %398
  %400 = vrot.lane.b32.xlu0 %v387, 18
  %v401 = vpop.permute.xlu0 %400
  %402 = vrot.lane.b32.xlu0 %v388, 18
  %v403 = vpop.permute.xlu0 %402
  %v404 = vsel %vm98, %v401, %v403
  %v405 = vsel %vm98, %v399, %v401
  %v406 = vsel %vm98, %v403, %v399
  %407 = vrot.lane.b32.xlu0 %v386, 17
  %v408 = vpop.permute.xlu0 %407
  %409 = vrot.lane.b32.xlu0 %v387, 17
  %v410 = vpop.permute.xlu0 %409
  %411 = vrot.lane.b32.xlu0 %v388, 17
  %v412 = vpop.permute.xlu0 %411
  %v413 = vsel %vm108, %v410, %v412
  %v414 = vsel %vm108, %v408, %v410
  %v415 = vsel %vm108, %v412, %v408
  %416 = vrot.lane.b32.xlu0 %v386, 1
  %v417 = vpop.permute.xlu0 %416
  %418 = vrot.lane.b32.xlu0 %v387, 1
  %v419 = vpop.permute.xlu0 %418
  %420 = vrot.lane.b32.xlu0 %v388, 1
  %v421 = vpop.permute.xlu0 %420
  %v422 = vsel %vm118, %v419, %v421
  %v423 = vsel %vm118, %v417, %v419
  %v424 = vsel %vm118, %v421, %v417
  %425 = vrot.lane.b32.xlu0 %v386, 127
  %v426 = vpop.permute.xlu0 %425
  %427 = vrot.lane.b32.xlu0 %v387, 127
  %v428 = vpop.permute.xlu0 %427
  %429 = vrot.lane.b32.xlu0 %v388, 127
  %v430 = vpop.permute.xlu0 %429
  %v431 = vsel %vm128, %v428, %v430
  %v432 = vsel %vm128, %v426, %v428
  %v433 = vsel %vm128, %v430, %v426
  %434 = vrot.lane.b32.xlu0 %v386, 111
  %v435 = vpop.permute.xlu0 %434
  %436 = vrot.lane.b32.xlu0 %v387, 111
  %v437 = vpop.permute.xlu0 %436
  %438 = vrot.lane.b32.xlu0 %v388, 111
  %v439 = vpop.permute.xlu0 %438
  %v440 = vsel %vm138, %v437, %v439
  %v441 = vsel %vm138, %v435, %v437
  %v442 = vsel %vm138, %v439, %v435
  %443 = vrot.lane.b32.xlu0 %v386, 110
  %v444 = vpop.permute.xlu0 %443
  %445 = vrot.lane.b32.xlu0 %v387, 110
  %v446 = vpop.permute.xlu0 %445
  %447 = vrot.lane.b32.xlu0 %v388, 110
  %v448 = vpop.permute.xlu0 %447
  %v449 = vsel %vm148, %v446, %v448
  %v450 = vsel %vm148, %v444, %v446
  %v451 = vsel %vm148, %v448, %v444
  %452 = vrot.lane.b32.xlu0 %v386, 109
  %v453 = vpop.permute.xlu0 %452
  %454 = vrot.lane.b32.xlu0 %v387, 109
  %v455 = vpop.permute.xlu0 %454
  %456 = vrot.lane.b32.xlu0 %v388, 109
  %v457 = vpop.permute.xlu0 %456
  %v458 = vsel %vm158, %v455, %v457
  %v459 = vsel %vm158, %v453, %v455
  %v460 = vsel %vm158, %v457, %v453
  %v461 = vld [vmem:[%s3] sm:$0xff]
  %v463 = vsel %vm163, %v461, 0
  %465 = vmatprep.subr.mxu0 %v396
  %466 = vmatpush1.msra.mxu0 %v397
  %467 = vmatprep.subr.mxu0 %v405
  %468 = vmatpush1.msra.mxu0 %v406
  %469 = vmatprep.subr.mxu0 %v414
  %470 = vmatpush1.msra.mxu0 %v415
  %471 = vmatprep.subr.mxu0 %v423
  %472 = vmatpush1.msra.mxu0 %v424
  %473 = vmatprep.subr.mxu0 %v387
  %474 = vmatpush1.msra.mxu0 %v386
  %475 = vmatprep.subr.mxu0 %v431
  %476 = vmatpush1.msra.mxu0 %v432
  %477 = vmatprep.subr.mxu0 %v440
  %478 = vmatpush1.msra.mxu0 %v441
  %479 = vmatprep.subr.mxu0 %v449
  %480 = vmatpush1.msra.mxu0 %v450
  %481 = vmatprep.subr.mxu0 %v458
  %482 = vmatpush1.msra.mxu0 %v459
  %483 = vmatprep.subr.mxu0 0.0
  %484 = vmatpush1.msra.mxu0 0.0
  %485 = vmatprep.subr.mxu0 0.0
  %486 = vmatpush1.msra.mxu0 0.0
  %487 = vmatprep.subr.mxu0 0.0
  %488 = vmatpush1.msra.mxu0 0.0
  %489 = vmatprep.subr.mxu0 0.0
  %490 = vmatpush1.msra.mxu0 0.0
  %491 = vmatprep.subr.mxu0 0.0
  %492 = vmatpush1.msra.mxu0 0.0
  %493 = vmatprep.subr.mxu0 0.0
  %494 = vmatpush1.msra.mxu0 0.0
  %495 = vmatprep.subr.mxu0 0.0
  %496 = vmatpush1.msra.mxu0 0.0
  %497 = vmatprep.subr.mxu0 0.0
  %498 = vmatpush1.msra.mxu0 0.0
  %499 = vmatprep.subr.mxu0 0.0
  %500 = vmatpush1.msra.mxu0 0.0
  %501 = vmatprep.subr.mxu0 0.0
  %502 = vmatpush1.msra.mxu0 0.0
  %503 = vmatprep.subr.mxu0 0.0
  %504 = vmatpush1.msra.mxu0 0.0
  %505 = vmatprep.subr.mxu0 0.0
  %506 = vmatpush1.msra.mxu0 0.0
  %507 = vmatprep.subr.mxu0 0.0
  %508 = vmatpush1.msra.mxu0 0.0
  %509 = vmatprep.subr.mxu0 0.0
  %510 = vmatpush1.msra.mxu0 0.0
  %511 = vmatprep.subr.mxu0 0.0
  %512 = vmatpush1.msra.mxu0 0.0
  %513 = vmatprep.subr.mxu0 0.0
  %514 = vmatpush1.msra.mxu0 0.0
  %515 = vmatprep.subr.mxu0 0.0
  %516 = vmatpush1.msra.mxu0 0.0
  %517 = vmatprep.subr.mxu0 0.0
  %518 = vmatpush1.msra.mxu0 0.0
  %519 = vmatprep.subr.mxu0 0.0
  %520 = vmatpush1.msra.mxu0 0.0
  %521 = vmatprep.subr.mxu0 0.0
  %522 = vmatpush1.msra.mxu0 0.0
  %523 = vmatprep.subr.mxu0 0.0
  %524 = vmatpush1.msra.mxu0 0.0
  %525 = vmatprep.subr.mxu0 0.0
  %526 = vmatpush1.msra.mxu0 0.0
  %527 = vmatprep.subr.mxu0 0.0
  %528 = vmatpush1.msra.mxu0 0.0
  %529 = vmatprep.mubr.f32.mxu0 0.0
  %530 = vmatmul.mubr.f32.gmra.mrb[0].mxu0 %v463
  %v531 = vpop.f32.mrb[0].mxu0
  %v532 = vadd.f32 0.0, %v531
  %v533 = vpop.f32.mrb[0].mxu0
  %v534 = vadd.f32 0.0, %v533
  %535 = vdwg.mxu0
  %536 = vmatprep.subr.mxu0 0.0
  %537 = vmatpush1.msra.mxu0 %v395
  %538 = vmatprep.subr.mxu0 0.0
  %539 = vmatpush1.msra.mxu0 %v404
  %540 = vmatprep.subr.mxu0 0.0
  %541 = vmatpush1.msra.mxu0 %v413
  %542 = vmatprep.subr.mxu0 0.0
  %543 = vmatpush1.msra.mxu0 %v422
  %544 = vmatprep.subr.mxu0 0.0
  %545 = vmatpush1.msra.mxu0 %v388
  %546 = vmatprep.subr.mxu0 0.0
  %547 = vmatpush1.msra.mxu0 %v433
  %548 = vmatprep.subr.mxu0 0.0
  %549 = vmatpush1.msra.mxu0 %v442
  %550 = vmatprep.subr.mxu0 0.0
  %551 = vmatpush1.msra.mxu0 %v451
  %552 = vmatprep.subr.mxu0 0.0
  %553 = vmatpush1.msra.mxu0 %v460
  %554 = vmatprep.subr.mxu0 0.0
  %555 = vmatpush1.msra.mxu0 0.0
  %556 = vmatprep.subr.mxu0 0.0
  %557 = vmatpush1.msra.mxu0 0.0
  %558 = vmatprep.subr.mxu0 0.0
  %559 = vmatpush1.msra.mxu0 0.0
  %560 = vmatprep.subr.mxu0 0.0
  %561 = vmatpush1.msra.mxu0 0.0
  %562 = vmatprep.subr.mxu0 0.0
  %563 = vmatpush1.msra.mxu0 0.0
  %564 = vmatprep.subr.mxu0 0.0
  %565 = vmatpush1.msra.mxu0 0.0
  %566 = vmatprep.subr.mxu0 0.0
  %567 = vmatpush1.msra.mxu0 0.0
  %568 = vmatprep.subr.mxu0 0.0
  %569 = vmatpush1.msra.mxu0 0.0
  %570 = vmatprep.subr.mxu0 0.0
  %571 = vmatpush1.msra.mxu0 0.0
  %572 = vmatprep.subr.mxu0 0.0
  %573 = vmatpush1.msra.mxu0 0.0
  %574 = vmatprep.subr.mxu0 0.0
  %575 = vmatpush1.msra.mxu0 0.0
  %576 = vmatprep.subr.mxu0 0.0
  %577 = vmatpush1.msra.mxu0 0.0
  %578 = vmatprep.subr.mxu0 0.0
  %579 = vmatpush1.msra.mxu0 0.0
  %580 = vmatprep.subr.mxu0 0.0
  %581 = vmatpush1.msra.mxu0 0.0
  %582 = vmatprep.subr.mxu0 0.0
  %583 = vmatpush1.msra.mxu0 0.0
  %584 = vmatprep.subr.mxu0 0.0
  %585 = vmatpush1.msra.mxu0 0.0
  %586 = vmatprep.subr.mxu0 0.0
  %587 = vmatpush1.msra.mxu0 0.0
  %588 = vmatprep.subr.mxu0 0.0
  %589 = vmatpush1.msra.mxu0 0.0
  %590 = vmatprep.subr.mxu0 0.0
  %591 = vmatpush1.msra.mxu0 0.0
  %592 = vmatprep.subr.mxu0 0.0
  %593 = vmatpush1.msra.mxu0 0.0
  %594 = vmatprep.subr.mxu0 0.0
  %595 = vmatpush1.msra.mxu0 0.0
  %596 = vmatprep.subr.mxu0 0.0
  %597 = vmatpush1.msra.mxu0 0.0
  %598 = vmatprep.subr.mxu0 0.0
  %599 = vmatpush1.msra.mxu0 0.0
  %600 = vmatprep.mubr.f32.mxu0 0.0
  %601 = vmatmul.mubr.f32.gmra.mrb[0].mxu0 %v463
  %v602 = vpop.f32.mrb[0].mxu0
  %v603 = vadd.f32 0.0, %v602
  %v604 = vpop.f32.mrb[0].mxu0
  %605 = vdwg.mxu0
  %v606 = vsel %vm65, %v532, 0.0
  %v607 = vsel %vm66, %v534, 0.0
  %v608 = vsel %vm67, %v603, 0.0
  %v609 = vadd.f32 %v606, %v607
  %v610 = vadd.f32 %v609, %v608
  %611 = vadd.xlane.f32.xlu0 %v610
  %v612 = vpop.xlane.xlu0 %611
  %v613 = vmul.f32 %v606, %v532
  %v614 = vmul.f32 %v607, %v534
  %v615 = vmul.f32 %v608, %v603
  %v616 = vadd.f32 %v613, %v614
  %v617 = vadd.f32 %v616, %v615
  %618 = vadd.xlane.f32.xlu0 %v617
  %v619 = vpop.xlane.xlu0 %618
  %v620 = vmul.f32 %v612, 0.00390625
  %v621 = vmul.f32 %v619, 0.00390625
  %v622 = vmul.f32 %v620, %v620
  %v623 = vsub.f32 %v621, %v622
  %v624 = vsub.f32 %v532, %v620
  %v625 = vsub.f32 %v534, %v620
  %v626 = vsub.f32 %v603, %v620
  %v627 = vadd.f32 %v623, 1e-05
  %v628 = vrsqrt.pop %v627
  %v629 = vmul.f32 %v624, %v628
  %v630 = vmul.f32 %v625, %v628
  %v631 = vmul.f32 %v626, %v628
  %v632 = vadd.f32 %v17, %v629
  %v633 = vadd.f32 %v18, %v630
  %v634 = vadd.f32 %v19, %v631
  %635 = vst [vmem:[%s4] sm:$0xff] %v632
  %636 = vst [vmem:[%s4 + $0x8] sm:$0xff] %v633
  %637 = vst [vmem:[%s4 + $0x10] sm:$0xff] %v634
  // Predicated region
  $region18: #{_residual_block_impl.1} parent=0 // pred_check
    _
  $region19: #{_residual_block_impl.1} parent=0 // pred_check_branch
    %639 = sbr.rel (0) target = $region21
  $region20: #{_residual_block_impl.1} parent=0 // pred_region
    _
  $region21: #{_residual_block_impl.1} parent=0 // pred_fallthru
    _
  // Predicated region
  $region22: #{_residual_block_impl.1} parent=0 // pred_check
    _
  $region23: #{_residual_block_impl.1} parent=0 // pred_check_branch
    %641 = sbr.rel (0) target = $region25
  $region24: #{_residual_block_impl.1} parent=0 // pred_region
    _
  $region25: #{_residual_block_impl.1} parent=0 // pred_fallthru
    _

</llo_original>
